<compile_context>
chip_gen: v7x
topology: tpu7x:2x2x1
jax: 0.10.0
libtpu: 0.0.40
codegen_flags: <defaults>
</compile_context>

<pallas_src>
import jax
import jax.numpy as jnp
from jax.experimental import pallas as pl
from jax.experimental.pallas import tpu as pltpu


def _vardrop_kernel(x_ref, m_ref, o_ref):
    # One fused multiply per vreg; m_ref broadcasts over the time axis
    # ((1, c_tile) vs (t_tile, c_tile), or (b_tile, 1, H) vs (b_tile, t_tile, H)).
    o_ref[...] = x_ref[...] * m_ref[...]


def _sublane_pack(itemsize: int) -> int:
    # Native sublane packing: 8 rows for 32-bit, 16 for 16-bit, 32 for 8-bit dtypes.
    return {1: 32, 2: 16, 4: 8}.get(itemsize, 8)


def _default_block_bytes() -> int:
    # v5e/v6e: 128 MiB VMEM per TensorCore -> ~16 MiB blocks.
    # v7x: only 64 MiB -> ~8 MiB blocks so 2x(in+out) buffers stay < ~48 MiB.
    try:
        info = pltpu.get_tpu_info()
        vmem = int(getattr(info, "vmem_capacity_bytes", 64 << 20))
    except Exception:
        vmem = 64 << 20
    return (16 << 20) if vmem >= (100 << 20) else (8 << 20)


def variational_dropout(x, dropout, seed, *, batch_first=False, training=True,
                        block_bytes=None, donate_x=False):
    """JAX/Pallas equivalent of VariationalDropout.forward for dense tensors.

    x: (T, B, H) if batch_first=False (PyTorch default), else (B, T, H).
    NOTE: the realized dropout pattern depends only on `seed` (not on tiling).
    """
    if (not training) or dropout <= 0.0:
        return x
    # TODO(synk): PackedSequence inputs have no JAX/Pallas equivalent; dense tensors only.

    if block_bytes is None:
        block_bytes = _default_block_bytes()
    block_bytes = int(block_bytes)

    if batch_first:
        B, T, H = x.shape
    else:
        T, B, H = x.shape

    itemsize = jnp.dtype(x.dtype).itemsize
    sub = _sublane_pack(itemsize)

    # ---- mask: per (batch, hidden), identical across time, 1/(1-p) folded in ----
    keep_prob = 1.0 - float(dropout)
    keep = jax.random.bernoulli(jax.random.PRNGKey(seed), p=keep_prob, shape=(B, H))
    scale = jnp.asarray(1.0 / keep_prob, dtype=x.dtype)
    mask = jnp.where(keep, scale, jnp.zeros((), dtype=x.dtype))

    # Independent output tiles -> both grid axes can shard across TensorCores.
    dims = ("parallel", "parallel")

    if not batch_first:
        # ---- time-major: lane-dense 2-D view (T, B*H) ----
        C = B * H
        x2 = x.reshape(T, C)
        m2 = mask.reshape(1, C)

        col_bytes = C * itemsize
        if col_bytes <= block_bytes:
            c_tile = C                                    # full dim -> always legal
            t_tile = max(1, block_bytes // col_bytes)
            if t_tile >= T:
                t_tile = T
            else:
                t_tile = min(T, max(sub, (t_tile // sub) * sub))
        else:
            t_tile = min(T, sub)
            c_tile = (block_bytes // (t_tile * itemsize)) // 128 * 128
            c_tile = max(128, min(c_tile, C))

        grid = (pl.cdiv(C, c_tile), pl.cdiv(T, t_tile))   # time innermost -> mask stays resident
        in_specs = [
            pl.BlockSpec((t_tile, c_tile), lambda ci, ti: (ti, ci)),
            pl.BlockSpec((1, c_tile), lambda ci, ti: (0, ci)),
        ]
        out_spec = pl.BlockSpec((t_tile, c_tile), lambda ci, ti: (ti, ci))
        out_shape = jax.ShapeDtypeStruct((T, C), x.dtype)
        blk_bytes = t_tile * c_tile * itemsize
        mask_bytes = c_tile * itemsize
        args = (x2, m2)
    else:
        # ---- batch-first: (b_tile, t_tile, H) blocks, no transpose copies ----
        m3 = mask.reshape(B, 1, H)

        seq_bytes = T * H * itemsize
        if seq_bytes <= block_bytes:
            t_tile = T
            b_tile = max(1, min(B, block_bytes // seq_bytes))
        else:
            b_tile = 1
            t_tile = max(1, block_bytes // (H * itemsize))
            if t_tile >= T:
                t_tile = T
            else:
                t_tile = min(T, max(sub, (t_tile // sub) * sub))

        grid = (pl.cdiv(B, b_tile), pl.cdiv(T, t_tile))   # time innermost -> mask stays resident
        in_specs = [
            pl.BlockSpec((b_tile, t_tile, H), lambda bi, ti: (bi, ti, 0)),
            pl.BlockSpec((b_tile, 1, H), lambda bi, ti: (bi, 0, 0)),
        ]
        out_spec = pl.BlockSpec((b_tile, t_tile, H), lambda bi, ti: (bi, ti, 0))
        out_shape = jax.ShapeDtypeStruct((B, T, H), x.dtype)
        blk_bytes = b_tile * t_tile * H * itemsize
        mask_bytes = b_tile * H * itemsize
        args = (x, m3)

    # Double-buffered input + output tiles, resident mask tile, plus headroom.
    vmem_limit = int(max(16 << 20, 4 * blk_bytes + 2 * mask_bytes + (4 << 20)))

    out = pl.pallas_call(
        _vardrop_kernel,
        out_shape=out_shape,
        grid=grid,
        in_specs=in_specs,
        out_specs=out_spec,
        input_output_aliases=({0: 0} if donate_x else {}),
        compiler_params=pltpu.CompilerParams(
            dimension_semantics=dims,
            vmem_limit_bytes=vmem_limit,
        ),
    )(*args)

    return out if batch_first else out.reshape(T, B, H)


if __name__ == "__main__":
    key = jax.random.PRNGKey(0)

    # batch_first=False (PyTorch default): x is (seq, batch, hidden).
    T, B, H = 8, 2, 32
    p = 0.5
    x = jax.random.normal(key, (T, B, H), dtype=jnp.float32)

    out = variational_dropout(x, dropout=p, seed=1234, batch_first=False, training=True)
    out = jax.block_until_ready(out)
    assert out.shape == (T, B, H)

    inv_keep = 1.0 / (1.0 - p)
    # (a) every element is 0 or x/(1-p); (b) the mask is identical across time.
    keep_mask = jnp.abs(out[0]) > 0.0                      # inferred (B, H) mask at t = 0
    expected = jnp.where(keep_mask[None, :, :], x * inv_keep, 0.0)
    assert jnp.allclose(out, expected, atol=1e-5, rtol=1e-5), "mask/scale mismatch"
    # (c) drop rate is roughly p (loose bound; failure prob ~0 for 64 draws).
    drop_frac = 1.0 - float(jnp.mean(keep_mask.astype(jnp.float32)))
    assert 0.02 < drop_frac < 0.98, f"implausible drop fraction {drop_frac}"

    # batch_first=True path (no transposes inside): must match the time-major result.
    xb = jnp.swapaxes(x, 0, 1)                              # (B, T, H)
    outb = variational_dropout(xb, dropout=p, seed=1234, batch_first=True, training=True)
    outb = jax.block_until_ready(outb)
    assert outb.shape == (B, T, H)
    keep_mask_b = jnp.abs(outb[:, 0, :]) > 0.0
    expected_b = jnp.where(keep_mask_b[:, None, :], xb * inv_keep, 0.0)
    assert jnp.allclose(outb, expected_b, atol=1e-5, rtol=1e-5), "batch_first mask/scale mismatch"
    assert jnp.allclose(outb, jnp.swapaxes(out, 0, 1), atol=1e-5, rtol=1e-5), "layout mismatch"

    # eval mode and p == 0 are identity.
    assert jnp.array_equal(
        variational_dropout(x, dropout=p, seed=1234, training=False), x)
    assert jnp.array_equal(
        variational_dropout(x, dropout=0.0, seed=1234, training=True), x)

    print("KERNEL_OK")
</pallas_src>

<mosaic_0001>
module attributes {stable_mosaic.version = 11 : i64} {
  func.func @_vardrop_kernel(%arg0: i32, %arg1: i32, %arg2: memref<8x64xf32, #tpu.memory_space<vmem>>, %arg3: memref<1x64xf32, #tpu.memory_space<vmem>>, %arg4: memref<8x64xf32, #tpu.memory_space<vmem>>) attributes {dimension_semantics = [#tpu.dimension_semantics<parallel>, #tpu.dimension_semantics<parallel>], iteration_bounds = array<i64: 1, 1>, scalar_prefetch = 0 : i64, scratch_operands = 0 : i64, tpu.core_type = #tpu.core_type<tc>, window_params = [{transform_indices = @transform_0, window_bounds = array<i64: 8, 64>}, {transform_indices = @transform_1, window_bounds = array<i64: 1, 64>}, {transform_indices = @transform_2, window_bounds = array<i64: 8, 64>}]} {
    %c0 = arith.constant 0 : index
    %c0_0 = arith.constant 0 : index
    %0 = vector.load %arg2[%c0, %c0_0] : memref<8x64xf32, #tpu.memory_space<vmem>>, vector<8x64xf32>
    %c0_1 = arith.constant 0 : index
    %c0_2 = arith.constant 0 : index
    %1 = vector.load %arg3[%c0_1, %c0_2] : memref<1x64xf32, #tpu.memory_space<vmem>>, vector<1x64xf32>
    %2 = vector.broadcast %1 : vector<1x64xf32> to vector<8x64xf32>
    %3 = arith.mulf %0, %2 : vector<8x64xf32>
    %c0_3 = arith.constant 0 : index
    %c0_4 = arith.constant 0 : index
    %4 = vector.load %arg4[%c0_3, %c0_4] : memref<8x64xf32, #tpu.memory_space<vmem>>, vector<8x64xf32>
    tpu.vector_store %arg4[%c0_3, %c0_4], %3 {strides = array<i32>} : memref<8x64xf32, #tpu.memory_space<vmem>>, vector<8x64xf32>,
    return
  }
  func.func @transform_0(%arg0: i32, %arg1: i32) -> (i32, i32) {
    %c0_i32 = arith.constant 0 : i32
    return %arg1, %arg0 : i32, i32
  }
  func.func @transform_1(%arg0: i32, %arg1: i32) -> (i32, i32) {
    %c0_i32 = arith.constant 0 : i32
    %c0_i32_0 = arith.constant 0 : i32
    return %c0_i32, %arg0 : i32, i32
  }
  func.func @transform_2(%arg0: i32, %arg1: i32) -> (i32, i32) {
    %c0_i32 = arith.constant 0 : i32
    return %arg1, %arg0 : i32, i32
  }
}

</mosaic_0001>

<llo_original>
// kernel: tpu_custom_call.1
$region0: #{tpu_custom_call.1}
  #allocation0 [shape = 'u32[]', space=smem, size = 0x4, offset = 0x4, fixed_abs, tag = 'smem constant byte address 0x4 - core index']
  #allocation1 [shape = 'u32[144,128]{1,0:T(1,128)}', space=vmem, size = 0x12000, scoped, tag = 'internal scratch']
  %s0 = inlined_call_operand.hbm [shape: f32[8,64], index: 0, kind: input, shape index: {}]
  %s1 = inlined_call_operand.vmem [shape: f32[1,64], index: 1, kind: input, shape index: {}]
  %s2 = inlined_call_operand.hbm [shape: f32[8,64], index: 2, kind: output, shape index: {}]
  %s3 = sld [smem:[#allocation0]]
  $region22: #{tpu_custom_call.1} parent=0
    _
  %s5 = ssub.s32 1, %s3
  %s6 = scalar_select 0, %s5, %s3
  $region1: #{tpu_custom_call.1} parent=0
    #allocation2 [shape = 'u8[4096]{0}', space=vmem, size = 0x1000, scoped, tag = 'input window, operand 0, single buffered']
    #allocation3 [shape = 's32[1]{0}', space=sflag, size = 0x4, scoped, tag = 'scoped memory for tpu_custom_call.1']
    #allocation4 [shape = 's32[1]{0}', space=sflag, size = 0x4, scoped, tag = 'scoped memory for tpu_custom_call.1']
    #allocation5 [shape = 'u8[4096]{0}', space=vmem, size = 0x1000, scoped, tag = 'output window, operand 0, single buffered']
    %7 = vsyncpa [#allocation3], 0
    %8 = vsyncpa [#allocation4], 0
    // Predicated region
    $region2: #{tpu_custom_call.1} parent=1 // pred_check
      _
    $region3: #{tpu_custom_call.1} parent=1 // pred_check_branch
      %10 = sbr.rel (0) target = $region5
    $region4: #{tpu_custom_call.1} parent=1 // pred_region
      %s12 = ssub.s32 128, 128
      %13 = vsyncadd [#allocation3], %s12
      %s15 = sshll.u32 [#allocation2], 4
      %s16 = int_to_ptr.vmem [resolvable:$true] %s15
      %18 = dma.hbm_to_vmem [thread:$0]  %s0, 128, %s16, [#allocation3]
    $region5: #{tpu_custom_call.1} parent=1 // pred_fallthru
      _
    // Predicated region
    $region6: #{tpu_custom_call.1} parent=1 // pred_check
      _
    $region7: #{tpu_custom_call.1} parent=1 // pred_check_branch
      %20 = sbr.rel (0) target = $region9
    $region8: #{tpu_custom_call.1} parent=1 // pred_region
      _
    $region9: #{tpu_custom_call.1} parent=1 // pred_fallthru
      _
    // Predicated region
    $region10: #{tpu_custom_call.1} parent=1 // pred_check
      _
    $region11: #{tpu_custom_call.1} parent=1 // pred_check_branch
      %22 = sbr.rel (0) target = $region13
    $region12: #{tpu_custom_call.1} parent=1 // pred_region
      %23 = dma.done [#allocation3], 128
    $region13: #{tpu_custom_call.1} parent=1 // pred_fallthru
      _
    %v24 = vld [vmem:[#allocation2] sm:$0xff]
    %v25 = vld [vmem:[%s1] sm:$0x1]
    %v27 = vlaneseq
    %v28 = vshrl.u32 %v27, 7
    %v29 = vsub.s32 0, %v28
    %v30 = vrot.slane %v25, %v29
    %v32 = vmul.f32 %v24, %v30
    %vm33 = vcmask 523264
    %34 = vst.msk [vmem:[#allocation5] sm:$0xff] %vm33, %v32
    // Predicated region
    $region14: #{tpu_custom_call.1} parent=1 // pred_check
      _
    $region15: #{tpu_custom_call.1} parent=1 // pred_check_branch
      %36 = sbr.rel (0) target = $region17
    $region16: #{tpu_custom_call.1} parent=1 // pred_region
      %s38 = ssub.s32 128, 128
      %39 = vsyncadd [#allocation4], %s38
      %s41 = sshll.u32 [#allocation5], 4
      %s42 = int_to_ptr.vmem [resolvable:$true] %s41
      %44 = dma.vmem_to_hbm [thread:$0]  %s42, 128, %s2, [#allocation4]
    $region17: #{tpu_custom_call.1} parent=1 // pred_fallthru
      _
    // Predicated region
    $region18: #{tpu_custom_call.1} parent=1 // pred_check
      _
    $region19: #{tpu_custom_call.1} parent=1 // pred_check_branch
      %46 = sbr.rel (0) target = $region21
    $region20: #{tpu_custom_call.1} parent=1 // pred_region
      %47 = dma.done [#allocation4], 128
    $region21: #{tpu_custom_call.1} parent=1 // pred_fallthru
      _
    %48 = vsyncpa [#allocation3], 1
    %49 = vsyncpa [#allocation4], 1

</llo_original>
